<compile_context>
chip_gen: v5e
topology: v5e:2x2
jax: 0.10.0
libtpu: 0.0.40
codegen_flags: <defaults>
</compile_context>

<pallas_src>
import functools

import jax
import jax.numpy as jnp
from jax.experimental import pallas as pl
from jax.experimental.pallas import tpu as pltpu


def attdec_kernel(x_ref, xr_ref, c_ref, out_x_ref, out_alpha_ref, *, K, T, Bb, D):
    # x_ref:        (1, S, D, N)   N = Bb*T, lane axis = packed (t, b) rows
    # xr_ref:       (1, 8, N)      rows 0..D-1 = x_ref^T, row D = ones, rest 0
    # c_ref:        (8, 8) f32     rows 0..D-1 = [Wq^T Wk | Wq^T bk | 0]
    # out_x_ref:    (1, D, N)
    # out_alpha_ref:(1, S, Bb)
    x = x_ref[0].astype(jnp.float32)          # (S, D, N)
    xr = xr_ref[0].astype(jnp.float32)        # (8, N)
    c = c_ref[...]                            # (8, 8)

    # key[d, n] = (Wq^T Wk x_ref[:, n])[d] + (Wq^T bk)[d]  -- lane-dense result.
    key = jnp.dot(c, xr, preferred_element_type=jnp.float32)[:D, :]   # (D, N)

    # logits[s, n] = x[s, :, n] . key[:, n]   (reduction over the sublane axis)
    logits = jnp.sum(x * key[None, :, :], axis=1)                     # (S, N)

    # softmax over the signal axis (leading axis) -- exact divide.
    m = jnp.max(logits, axis=0, keepdims=True)
    e = jnp.exp(logits - m)
    alpha = e / jnp.sum(e, axis=0, keepdims=True)                     # (S, N)
    if K == 0:
        alpha = alpha + 1.0

    # out_x[d, n] = sum_s alpha[s, n] * x[s, d, n]  (reduction over leading axis)
    xw = jnp.sum(alpha[:, None, :] * x, axis=0)                       # (D, N)
    out_x_ref[0] = xw.astype(out_x_ref.dtype)

    # per-batch mean over T: columns are ordered n = t*Bb + b, so the T-mean is
    # a sum of T contiguous lane slices of width Bb (no strided gather).
    acc = alpha[:, 0:Bb]
    for t in range(1, T):
        acc = acc + alpha[:, t * Bb:(t + 1) * Bb]
    out_alpha_ref[0] = (acc * (1.0 / T)).astype(out_alpha_ref.dtype)


def _num_tensorcores():
    """Best-effort TensorCore-per-chip count (v7x -> 2); defaults to 1."""
    try:
        info = pltpu.get_tpu_info()
        for name in ("num_cores", "tensorcore_count", "num_tensorcores",
                     "cores_per_chip"):
            v = getattr(info, name, None)
            if isinstance(v, int) and v >= 1:
                return int(v)
    except Exception:
        pass
    try:
        v = getattr(jax.devices()[0], "num_cores", None)
        if isinstance(v, int) and v >= 1:
            return int(v)
    except Exception:
        pass
    return 1


def _pick_grid(bs, n_cores):
    """One grid step on 1-TC chips (per-step overhead dominates at these dims);
    split the batch across cores only when >1 TC and bs divides evenly."""
    if n_cores > 1 and bs % n_cores == 0:
        return n_cores, bs // n_cores
    return 1, bs


def attdec_forward(x, x_refv, wq, bq, wk, bk, K=0):
    bs, T, S, D = x.shape
    H = wq.shape[0]
    dtype = x.dtype
    DP = 8                                   # padded row count for the key matmul

    G, Bb = _pick_grid(bs, _num_tensorcores())
    N = Bb * T                               # lane width of each block

    # ---- one-time layout plumbing (wrapper side, not per grid step) ----------
    # x: (bs,T,S,D) -> (G, S, D, T*Bb)   lane axis = packed (t, b_local) rows
    x_t = x.reshape(G, Bb, T, S, D).transpose(0, 3, 4, 2, 1).reshape(G, S, D, N)
    # x_ref: (bs,T,D) -> (G, D, N), append ones row (bias fold) + zero pad to 8.
    xr_t = x_refv.reshape(G, Bb, T, D).transpose(0, 3, 2, 1).reshape(G, D, N)
    xr_t = xr_t.astype(jnp.float32)
    ones_row = jnp.ones((G, 1, N), jnp.float32)
    zero_rows = jnp.zeros((G, DP - D - 1, N), jnp.float32)
    xr_aug = jnp.concatenate([xr_t, ones_row, zero_rows], axis=1)     # (G, 8, N)

    # Constant: C[:D,:D] = Wq^T Wk, C[:D, D] = Wq^T bk, rest zero.
    m_fold = jnp.dot(wq.T, wk, preferred_element_type=jnp.float32)            # (D,D)
    u_fold = jnp.dot(wq.T, bk.reshape(H, 1), preferred_element_type=jnp.float32)
    c = jnp.zeros((DP, DP), jnp.float32)
    c = c.at[:D, :D].set(m_fold).at[:D, D].set(u_fold[:, 0])

    kern = functools.partial(attdec_kernel, K=K, T=T, Bb=Bb, D=D)
    out_x_t, out_alpha_t = pl.pallas_call(
        kern,
        out_shape=(
            jax.ShapeDtypeStruct((G, D, N), dtype),
            jax.ShapeDtypeStruct((G, S, Bb), dtype),
        ),
        grid_spec=pltpu.PrefetchScalarGridSpec(
            num_scalar_prefetch=0,
            grid=(G,),
            in_specs=[
                pl.BlockSpec((1, S, D, N), lambda g: (g, 0, 0, 0)),   # x (lane-dense)
                pl.BlockSpec((1, DP, N),   lambda g: (g, 0, 0)),      # x_ref (+ones)
                pl.BlockSpec((DP, DP),     lambda g: (0, 0)),         # folded consts
            ],
            out_specs=[
                pl.BlockSpec((1, D, N),    lambda g: (g, 0, 0)),      # out_x slab
                pl.BlockSpec((1, S, Bb),   lambda g: (g, 0, 0)),      # out_alpha slab
            ],
        ),
        compiler_params=pltpu.CompilerParams(
            dimension_semantics=("parallel",)),
    )(x_t, xr_aug, c)

    # ---- un-transpose back to the PyTorch output layout ----------------------
    out_x = out_x_t.reshape(G, D, T, Bb).transpose(0, 3, 2, 1).reshape(bs, T, D)
    out_alpha = out_alpha_t.transpose(0, 2, 1).reshape(bs, S)
    return out_x, out_alpha


def attdec_reference(x, x_refv, wq, bq, wk, bk, K=0):
    """Pure-JAX reference mirroring the PyTorch forward (uses the original
    H=32 projections, so it also validates the algebraic folding)."""
    H = wq.shape[0]
    q = jnp.einsum('btsd,hd->btsh', x, wq) + bq.reshape(H)
    k = jnp.einsum('btd,hd->bth', x_refv, wk) + bk.reshape(H)
    logits = jnp.einsum('btsh,bth->bts', q, k)
    alpha = jax.nn.softmax(logits, axis=2)
    if K == 0:
        alpha = alpha + 1.0
    xw = jnp.einsum('bts,btsd->btd', alpha, x)
    alpha_mean = jnp.mean(alpha, axis=1)
    return xw, alpha_mean


if __name__ == "__main__":
    d_feat, hidden = 6, 32
    root_key = jax.random.PRNGKey(0)

    def make_inputs(key, bs, T, S):
        kx, kxr, kwq, kbq, kwk, kbk = jax.random.split(key, 6)
        x = jax.random.normal(kx, (bs, T, S, d_feat), dtype=jnp.float32)
        xr = jax.random.normal(kxr, (bs, T, d_feat), dtype=jnp.float32)
        bound = 1.0 / (d_feat ** 0.5)     # nn.Linear-style fan-in scaling
        wq = jax.random.uniform(kwq, (hidden, d_feat), jnp.float32, -bound, bound)
        bq = jax.random.uniform(kbq, (1, hidden), jnp.float32, -bound, bound)
        wk = jax.random.uniform(kwk, (hidden, d_feat), jnp.float32, -bound, bound)
        bk = jax.random.uniform(kbk, (1, hidden), jnp.float32, -bound, bound)
        return x, xr, wq, bq, wk, bk

    # (bs, T, n_signal, K): the standard K=0 case and a small K!=0 case.
    configs = [(16, 4, 8, 0), (2, 4, 8, 1)]
    for i, (bs, T, S, K) in enumerate(configs):
        x, xr, wq, bq, wk, bk = make_inputs(jax.random.fold_in(root_key, i),
                                            bs, T, S)
        out_x, out_alpha = attdec_forward(x, xr, wq, bq, wk, bk, K=K)
        jax.block_until_ready((out_x, out_alpha))

        ref_x, ref_alpha = attdec_reference(x, xr, wq, bq, wk, bk, K=K)

        assert out_x.shape == (bs, T, d_feat)
        assert out_alpha.shape == (bs, S)
        assert jnp.allclose(out_x, ref_x, atol=1e-3, rtol=1e-3), \
            float(jnp.max(jnp.abs(out_x - ref_x)))
        assert jnp.allclose(out_alpha, ref_alpha, atol=1e-3, rtol=1e-3), \
            float(jnp.max(jnp.abs(out_alpha - ref_alpha)))

    print("KERNEL_OK")
</pallas_src>

<mosaic_0001>
module attributes {stable_mosaic.version = 11 : i64} {
  func.func @attdec_kernel(%arg0: i32, %arg1: memref<1x8x6x64xf32, #tpu.memory_space<vmem>>, %arg2: memref<1x8x64xf32, #tpu.memory_space<vmem>>, %arg3: memref<8x8xf32, #tpu.memory_space<vmem>>, %arg4: memref<1x6x64xf32, #tpu.memory_space<vmem>>, %arg5: memref<1x8x16xf32, #tpu.memory_space<vmem>>) attributes {dimension_semantics = [#tpu.dimension_semantics<parallel>], iteration_bounds = array<i64: 1>, scalar_prefetch = 0 : i64, scratch_operands = 0 : i64, tpu.core_type = #tpu.core_type<tc>, window_params = [{transform_indices = @transform_0, window_bounds = array<i64: 1, 8, 6, 64>}, {transform_indices = @transform_1, window_bounds = array<i64: 1, 8, 64>}, {pipeline_mode = #tpu.pipeline_mode<synchronous>, transform_indices = @transform_2, window_bounds = array<i64: 8, 8>}, {transform_indices = @transform_3, window_bounds = array<i64: 1, 6, 64>}, {transform_indices = @transform_4, window_bounds = array<i64: 1, 8, 16>}]} {
    %c0 = arith.constant 0 : index
    %c0_0 = arith.constant 0 : index
    %c0_1 = arith.constant 0 : index
    %c0_2 = arith.constant 0 : index
    %0 = vector.load %arg1[%c0, %c0_0, %c0_1, %c0_2] : memref<1x8x6x64xf32, #tpu.memory_space<vmem>>, vector<1x8x6x64xf32>
    %1 = vector.shape_cast %0 : vector<1x8x6x64xf32> to vector<8x6x64xf32>
    %c0_3 = arith.constant 0 : index
    %c0_4 = arith.constant 0 : index
    %c0_5 = arith.constant 0 : index
    %2 = vector.load %arg2[%c0_3, %c0_4, %c0_5] : memref<1x8x64xf32, #tpu.memory_space<vmem>>, vector<1x8x64xf32>
    %3 = vector.shape_cast %2 : vector<1x8x64xf32> to vector<8x64xf32>
    %c0_6 = arith.constant 0 : index
    %c0_7 = arith.constant 0 : index
    %4 = vector.load %arg3[%c0_6, %c0_7] : memref<8x8xf32, #tpu.memory_space<vmem>>, vector<8x8xf32>
    %cst = arith.constant dense<0.000000e+00> : vector<8x64xf32>
    %5 = tpu.matmul %4, %3, %cst {dimension_numbers = #tpu.dot_dimension_numbers<[1], [0], [0], [1], [0, 0, 1, 1], [], []>} : vector<8x8xf32>, vector<8x64xf32>, vector<8x64xf32> -> vector<8x64xf32>
    %6 = vector.extract_strided_slice %5 {offsets = [0, 0], sizes = [6, 64], strides = [1, 1]} : vector<8x64xf32> to vector<6x64xf32>
    %7 = vector.shape_cast %6 : vector<6x64xf32> to vector<1x6x64xf32>
    %8 = vector.broadcast %7 : vector<1x6x64xf32> to vector<8x6x64xf32>
    %9 = arith.mulf %1, %8 : vector<8x6x64xf32>
    %cst_8 = arith.constant dense<0.000000e+00> : vector<8x64xf32>
    %10 = vector.multi_reduction <add>, %9, %cst_8 [1] : vector<8x6x64xf32> to vector<8x64xf32>
    %cst_9 = arith.constant dense<0xFF800000> : vector<64xf32>
    %11 = vector.multi_reduction <maximumf>, %10, %cst_9 [0] : vector<8x64xf32> to vector<64xf32>
    %12 = vector.shape_cast %11 : vector<64xf32> to vector<1x64xf32>
    %13 = vector.broadcast %12 : vector<1x64xf32> to vector<8x64xf32>
    %14 = arith.subf %10, %13 : vector<8x64xf32>
    %15 = math.exp %14 : vector<8x64xf32>
    %cst_10 = arith.constant dense<0.000000e+00> : vector<64xf32>
    %16 = vector.multi_reduction <add>, %15, %cst_10 [0] : vector<8x64xf32> to vector<64xf32>
    %17 = vector.shape_cast %16 : vector<64xf32> to vector<1x64xf32>
    %18 = vector.broadcast %17 : vector<1x64xf32> to vector<8x64xf32>
    %19 = arith.divf %15, %18 : vector<8x64xf32>
    %cst_11 = arith.constant 1.000000e+00 : f32
    %20 = vector.broadcast %cst_11 : f32 to vector<8x64xf32>
    %21 = arith.addf %19, %20 : vector<8x64xf32>
    %22 = vector.shape_cast %21 : vector<8x64xf32> to vector<8x1x64xf32>
    %23 = vector.broadcast %22 : vector<8x1x64xf32> to vector<8x6x64xf32>
    %24 = arith.mulf %23, %1 : vector<8x6x64xf32>
    %cst_12 = arith.constant dense<0.000000e+00> : vector<6x64xf32>
    %25 = vector.multi_reduction <add>, %24, %cst_12 [0] : vector<8x6x64xf32> to vector<6x64xf32>
    %c0_13 = arith.constant 0 : index
    %c0_14 = arith.constant 0 : index
    %c0_15 = arith.constant 0 : index
    %26 = vector.load %arg4[%c0_13, %c0_14, %c0_15] : memref<1x6x64xf32, #tpu.memory_space<vmem>>, vector<1x6x64xf32>
    %27 = vector.shape_cast %26 : vector<1x6x64xf32> to vector<6x64xf32>
    %28 = vector.shape_cast %25 : vector<6x64xf32> to vector<1x6x64xf32>
    tpu.vector_store %arg4[%c0_13, %c0_14, %c0_15], %28 {strides = array<i32>} : memref<1x6x64xf32, #tpu.memory_space<vmem>>, vector<1x6x64xf32>,
    %29 = vector.extract_strided_slice %21 {offsets = [0, 0], sizes = [8, 16], strides = [1, 1]} : vector<8x64xf32> to vector<8x16xf32>
    %30 = vector.extract_strided_slice %21 {offsets = [0, 16], sizes = [8, 16], strides = [1, 1]} : vector<8x64xf32> to vector<8x16xf32>
    %31 = arith.addf %29, %30 : vector<8x16xf32>
    %32 = vector.extract_strided_slice %21 {offsets = [0, 32], sizes = [8, 16], strides = [1, 1]} : vector<8x64xf32> to vector<8x16xf32>
    %33 = arith.addf %31, %32 : vector<8x16xf32>
    %34 = vector.extract_strided_slice %21 {offsets = [0, 48], sizes = [8, 16], strides = [1, 1]} : vector<8x64xf32> to vector<8x16xf32>
    %35 = arith.addf %33, %34 : vector<8x16xf32>
    %cst_16 = arith.constant 2.500000e-01 : f32
    %36 = vector.broadcast %cst_16 : f32 to vector<8x16xf32>
    %37 = arith.mulf %35, %36 : vector<8x16xf32>
    %c0_17 = arith.constant 0 : index
    %c0_18 = arith.constant 0 : index
    %c0_19 = arith.constant 0 : index
    %38 = vector.load %arg5[%c0_17, %c0_18, %c0_19] : memref<1x8x16xf32, #tpu.memory_space<vmem>>, vector<1x8x16xf32>
    %39 = vector.shape_cast %38 : vector<1x8x16xf32> to vector<8x16xf32>
    %40 = vector.shape_cast %37 : vector<8x16xf32> to vector<1x8x16xf32>
    tpu.vector_store %arg5[%c0_17, %c0_18, %c0_19], %40 {strides = array<i32>} : memref<1x8x16xf32, #tpu.memory_space<vmem>>, vector<1x8x16xf32>,
    return
  }
  func.func @transform_0(%arg0: i32) -> (i32, i32, i32, i32) {
    %c0_i32 = arith.constant 0 : i32
    %c0_i32_0 = arith.constant 0 : i32
    %c0_i32_1 = arith.constant 0 : i32
    %c0_i32_2 = arith.constant 0 : i32
    return %arg0, %c0_i32, %c0_i32_0, %c0_i32_1 : i32, i32, i32, i32
  }
  func.func @transform_1(%arg0: i32) -> (i32, i32, i32) {
    %c0_i32 = arith.constant 0 : i32
    %c0_i32_0 = arith.constant 0 : i32
    %c0_i32_1 = arith.constant 0 : i32
    return %arg0, %c0_i32, %c0_i32_0 : i32, i32, i32
  }
  func.func @transform_2(%arg0: i32) -> (i32, i32) {
    %c0_i32 = arith.constant 0 : i32
    %c0_i32_0 = arith.constant 0 : i32
    %c0_i32_1 = arith.constant 0 : i32
    return %c0_i32, %c0_i32_0 : i32, i32
  }
  func.func @transform_3(%arg0: i32) -> (i32, i32, i32) {
    %c0_i32 = arith.constant 0 : i32
    %c0_i32_0 = arith.constant 0 : i32
    %c0_i32_1 = arith.constant 0 : i32
    return %arg0, %c0_i32, %c0_i32_0 : i32, i32, i32
  }
  func.func @transform_4(%arg0: i32) -> (i32, i32, i32) {
    %c0_i32 = arith.constant 0 : i32
    %c0_i32_0 = arith.constant 0 : i32
    %c0_i32_1 = arith.constant 0 : i32
    return %arg0, %c0_i32, %c0_i32_0 : i32, i32, i32
  }
}

</mosaic_0001>

<llo_original>
// kernel: tpu_custom_call.1
$region0: #{tpu_custom_call.1}
  #allocation0 [shape = 'u32[]', space=smem, size = 0x4, offset = 0x4, fixed_abs, tag = 'smem constant byte address 0x4 - core index']
  #allocation1 [shape = 'u32[72,128]{1,0:T(1,128)}', space=vmem, size = 0x9000, scoped, tag = 'internal scratch']
  %s0 = inlined_call_operand.vmem [shape: f32[1,8,6,64], index: 0, kind: input, shape index: {}]
  %s1 = inlined_call_operand.vmem [shape: f32[1,8,64], index: 1, kind: input, shape index: {}]
  %s2 = inlined_call_operand.vmem [shape: f32[8,8], index: 2, kind: input, shape index: {}]
  %s3 = inlined_call_operand.vmem [shape: f32[1,6,64], index: 3, kind: output, shape index: {0}]
  %s4 = inlined_call_operand.hbm [shape: f32[1,8,16], index: 4, kind: output, shape index: {1}]
  %5 = xla_tuple %s3, %s4
  %s6 = sld [smem:[#allocation0]]
  $region30: #{tpu_custom_call.1} parent=0
    _
  %s8 = ssub.s32 1, %s6
  %s9 = scalar_select 0, %s8, %s6
  $region1: #{tpu_custom_call.1} parent=0
    #allocation2 [shape = 'u8[4096]{0}', space=vmem, size = 0x1000, scoped, tag = 'output window, operand 1, single buffered']
    #allocation3 [shape = 's32[1]{0}', space=sflag, size = 0x4, scoped, tag = 'scoped memory for tpu_custom_call.1']
    %10 = vsyncpa [#allocation3], 0
    // Predicated region
    $region2: #{tpu_custom_call.1} parent=1 // pred_check
      _
    $region3: #{tpu_custom_call.1} parent=1 // pred_check_branch
      %12 = sbr.rel (0) target = $region5
    $region4: #{tpu_custom_call.1} parent=1 // pred_region
      _
    $region5: #{tpu_custom_call.1} parent=1 // pred_fallthru
      _
    // Predicated region
    $region6: #{tpu_custom_call.1} parent=1 // pred_check
      _
    $region7: #{tpu_custom_call.1} parent=1 // pred_check_branch
      %14 = sbr.rel (0) target = $region9
    $region8: #{tpu_custom_call.1} parent=1 // pred_region
      _
    $region9: #{tpu_custom_call.1} parent=1 // pred_fallthru
      _
    // Predicated region
    $region10: #{tpu_custom_call.1} parent=1 // pred_check
      _
    $region11: #{tpu_custom_call.1} parent=1 // pred_check_branch
      %16 = sbr.rel (0) target = $region13
    $region12: #{tpu_custom_call.1} parent=1 // pred_region
      _
    $region13: #{tpu_custom_call.1} parent=1 // pred_fallthru
      _
    %v17 = vld [vmem:[%s0] sm:$0x3f]
    %v18 = vld [vmem:[%s0 + $0x8] sm:$0x3f]
    %v19 = vld [vmem:[%s0 + $0x10] sm:$0x3f]
    %v20 = vld [vmem:[%s0 + $0x18] sm:$0x3f]
    %v21 = vld [vmem:[%s0 + $0x20] sm:$0x3f]
    %v22 = vld [vmem:[%s0 + $0x28] sm:$0x3f]
    %v23 = vld [vmem:[%s0 + $0x30] sm:$0x3f]
    %v24 = vld [vmem:[%s0 + $0x38] sm:$0x3f]
    %v25 = vld [vmem:[%s1] sm:$0xff]
    %v26 = vld [vmem:[%s2] sm:$0xff]
    %vm27 = vcmask 64512
    %v29 = vsel %vm27, %v26, 0
    %31 = vmatpush.msra.mxu0 0.0
    %32 = vmatpush.msra.mxu0 0.0
    %33 = vmatpush.msra.mxu0 0.0
    %34 = vmatpush.msra.mxu0 0.0
    %35 = vmatpush.msra.mxu0 0.0
    %36 = vmatpush.msra.mxu0 0.0
    %37 = vmatpush.msra.mxu0 0.0
    %38 = vmatpush.msra.mxu0 0.0
    %39 = vmatpush.msra.mxu0 0.0
    %40 = vmatpush.msra.mxu0 0.0
    %41 = vmatpush.msra.mxu0 0.0
    %42 = vmatpush.msra.mxu0 0.0
    %43 = vmatpush.msra.mxu0 0.0
    %44 = vmatpush.msra.mxu0 0.0
    %45 = vmatpush.msra.mxu0 0.0
    %46 = vmatpush.msra.mxu0 %v25
    %47 = vmatmul.f32.gmra.mxu0 %v29
    %v48 = vpop.f32.mrf.mxu0
    %v49 = vadd.f32 0.0, %v48
    %50 = vdwg.mxu0
    %v51 = vmul.f32 %v17, %v49
    %v52 = vmul.f32 %v18, %v49
    %v53 = vmul.f32 %v19, %v49
    %v54 = vmul.f32 %v20, %v49
    %v55 = vmul.f32 %v21, %v49
    %v56 = vmul.f32 %v22, %v49
    %v57 = vmul.f32 %v23, %v49
    %v58 = vmul.f32 %v24, %v49
    %vm59 = vcmask 521216
    %v60 = vsel %vm59, %v51, 0.0
    %v61 = vrot.slane %v60, 4
    %v62 = vadd.f32 %v60, %v61
    %v63 = vrot.slane %v62, 2
    %v64 = vadd.f32 %v62, %v63
    %v65 = vrot.slane %v64, 1
    %v66 = vadd.f32 %v64, %v65
    %v67 = vsel %vm59, %v52, 0.0
    %v68 = vrot.slane %v67, 4
    %v69 = vadd.f32 %v67, %v68
    %v70 = vrot.slane %v69, 2
    %v71 = vadd.f32 %v69, %v70
    %v72 = vrot.slane %v71, 1
    %v73 = vadd.f32 %v71, %v72
    %v74 = vsel %vm59, %v53, 0.0
    %v75 = vrot.slane %v74, 4
    %v76 = vadd.f32 %v74, %v75
    %v77 = vrot.slane %v76, 2
    %v78 = vadd.f32 %v76, %v77
    %v79 = vrot.slane %v78, 1
    %v80 = vadd.f32 %v78, %v79
    %v81 = vsel %vm59, %v54, 0.0
    %v82 = vrot.slane %v81, 4
    %v83 = vadd.f32 %v81, %v82
    %v84 = vrot.slane %v83, 2
    %v85 = vadd.f32 %v83, %v84
    %v86 = vrot.slane %v85, 1
    %v87 = vadd.f32 %v85, %v86
    %v88 = vsel %vm59, %v55, 0.0
    %v89 = vrot.slane %v88, 4
    %v90 = vadd.f32 %v88, %v89
    %v91 = vrot.slane %v90, 2
    %v92 = vadd.f32 %v90, %v91
    %v93 = vrot.slane %v92, 1
    %v94 = vadd.f32 %v92, %v93
    %v95 = vsel %vm59, %v56, 0.0
    %v96 = vrot.slane %v95, 4
    %v97 = vadd.f32 %v95, %v96
    %v98 = vrot.slane %v97, 2
    %v99 = vadd.f32 %v97, %v98
    %v100 = vrot.slane %v99, 1
    %v101 = vadd.f32 %v99, %v100
    %v102 = vsel %vm59, %v57, 0.0
    %v103 = vrot.slane %v102, 4
    %v104 = vadd.f32 %v102, %v103
    %v105 = vrot.slane %v104, 2
    %v106 = vadd.f32 %v104, %v105
    %v107 = vrot.slane %v106, 1
    %v108 = vadd.f32 %v106, %v107
    %v109 = vsel %vm59, %v58, 0.0
    %v110 = vrot.slane %v109, 4
    %v111 = vadd.f32 %v109, %v110
    %v112 = vrot.slane %v111, 2
    %v113 = vadd.f32 %v111, %v112
    %v114 = vrot.slane %v113, 1
    %v115 = vadd.f32 %v113, %v114
    %vm116 = vcmask 523264
    %v117 = vsel %vm116, %v66, -inf
    %v118 = vsel %vm116, %v73, -inf
    %v119 = vsel %vm116, %v80, -inf
    %v120 = vsel %vm116, %v87, -inf
    %v121 = vsel %vm116, %v94, -inf
    %v122 = vmax.f32 %v117, %v121
    %v123 = vsel %vm116, %v101, -inf
    %v124 = vmax.f32 %v118, %v123
    %v125 = vsel %vm116, %v108, -inf
    %v126 = vmax.f32 %v119, %v125
    %v127 = vsel %vm116, %v115, -inf
    %v128 = vmax.f32 %v120, %v127
    %v129 = vmax.f32 %v122, %v124
    %v130 = vmax.f32 %v126, %v128
    %v131 = vmax.f32 %v129, %v130
    %v132 = vsub.f32 %v66, %v131
    %v133 = vsub.f32 %v73, %v131
    %v134 = vsub.f32 %v80, %v131
    %v135 = vsub.f32 %v87, %v131
    %v136 = vsub.f32 %v94, %v131
    %v137 = vsub.f32 %v101, %v131
    %v138 = vsub.f32 %v108, %v131
    %v139 = vsub.f32 %v115, %v131
    %v140 = vmul.f32 %v132, 1.442695
    %v141 = vpow.pop %v140
    %v142 = vmul.f32 %v133, 1.442695
    %v143 = vpow.pop %v142
    %v144 = vmul.f32 %v134, 1.442695
    %v145 = vpow.pop %v144
    %v146 = vmul.f32 %v135, 1.442695
    %v147 = vpow.pop %v146
    %v148 = vmul.f32 %v136, 1.442695
    %v149 = vpow.pop %v148
    %v150 = vmul.f32 %v137, 1.442695
    %v151 = vpow.pop %v150
    %v152 = vmul.f32 %v138, 1.442695
    %v153 = vpow.pop %v152
    %v154 = vmul.f32 %v139, 1.442695
    %v155 = vpow.pop %v154
    %v164 = vrot.slane %v143, 7
    %vm165 = vcmask 1041409
    %v166 = vsel %vm165, %v164, %v141
    %v167 = vrot.slane %v145, 6
    %vm168 = vcmask 1042434
    %v169 = vsel %vm168, %v167, %v166
    %v170 = vrot.slane %v147, 5
    %vm171 = vcmask 1043459
    %v172 = vsel %vm171, %v170, %v169
    %v173 = vrot.slane %v149, 4
    %vm174 = vcmask 1044484
    %v175 = vsel %vm174, %v173, %v172
    %v176 = vrot.slane %v151, 3
    %vm177 = vcmask 1045509
    %v178 = vsel %vm177, %v176, %v175
    %v179 = vrot.slane %v153, 2
    %vm180 = vcmask 1046534
    %v181 = vsel %vm180, %v179, %v178
    %v182 = vrot.slane %v155, 1
    %vm183 = vcmask 1047559
    %v184 = vsel %vm183, %v182, %v181
    %v186 = vsel %vm116, %v184, 0.0
    %v187 = vrot.slane %v186, 4
    %v188 = vadd.f32 %v186, %v187
    %v189 = vrot.slane %v188, 2
    %v190 = vadd.f32 %v188, %v189
    %v191 = vrot.slane %v190, 1
    %v192 = vadd.f32 %v190, %v191
    %v193 = vperm.slane %v192, 0
    %v194 = vrcp.pop %v193
    %v195 = vmul.f32 %v193, %v194
    %v196 = vsub.f32 1.0, %v195
    %v197 = vmul.f32 %v194, %v196
    %v198 = vadd.f32 %v194, %v197
    %vm199 = vweird.f32 %v193
    %vm200 = vweird.f32 %v194
    %vm201 = vmor %vm199, %vm200
    %v202 = vsel %vm201, %v194, %v198
    %v203 = vand.u32 2147483647, %v193
    %vm204 = vcmp.eq.f32.partialorder %v203, 8.507059e+37
    %v205 = vand.u32 %v193, 2147483648
    %v206 = vor.u32 1.1754944e-38, %v205
    %v207 = vsel %vm204, %v206, %v202
    %v208 = vmul.f32 %v141, %v207
    %v209 = vmul.f32 %v143, %v207
    %v210 = vmul.f32 %v145, %v207
    %v211 = vmul.f32 %v147, %v207
    %v212 = vmul.f32 %v149, %v207
    %v213 = vmul.f32 %v151, %v207
    %v214 = vmul.f32 %v153, %v207
    %v215 = vmul.f32 %v155, %v207
    %v216 = vadd.f32 %v208, 1.0
    %v217 = vadd.f32 %v209, 1.0
    %v218 = vadd.f32 %v210, 1.0
    %v219 = vadd.f32 %v211, 1.0
    %v220 = vadd.f32 %v212, 1.0
    %v221 = vadd.f32 %v213, 1.0
    %v222 = vadd.f32 %v214, 1.0
    %v223 = vadd.f32 %v215, 1.0
    %v224 = vperm.slane %v216, 0
    %v225 = vperm.slane %v217, 0
    %v226 = vperm.slane %v218, 0
    %v227 = vperm.slane %v219, 0
    %v228 = vperm.slane %v220, 0
    %v229 = vperm.slane %v221, 0
    %v230 = vperm.slane %v222, 0
    %v231 = vperm.slane %v223, 0
    %v232 = vmul.f32 %v224, %v17
    %v233 = vmul.f32 %v225, %v18
    %v234 = vmul.f32 %v226, %v19
    %v235 = vmul.f32 %v227, %v20
    %v236 = vmul.f32 %v228, %v21
    %v237 = vmul.f32 %v229, %v22
    %v238 = vmul.f32 %v230, %v23
    %v239 = vmul.f32 %v231, %v24
    %v240 = vsel %vm59, %v232, 0.0
    %v241 = vsel %vm59, %v233, 0.0
    %v242 = vadd.f32 %v240, %v241
    %v243 = vsel %vm59, %v234, 0.0
    %v244 = vadd.f32 %v242, %v243
    %v245 = vsel %vm59, %v235, 0.0
    %v246 = vadd.f32 %v244, %v245
    %v247 = vsel %vm59, %v236, 0.0
    %v248 = vadd.f32 %v246, %v247
    %v249 = vsel %vm59, %v237, 0.0
    %v250 = vadd.f32 %v248, %v249
    %v251 = vsel %vm59, %v238, 0.0
    %v252 = vadd.f32 %v250, %v251
    %v253 = vsel %vm59, %v239, 0.0
    %v254 = vadd.f32 %v252, %v253
    %255 = vst.msk [vmem:[%s3] sm:$0x3f] %vm59, %v254
    %264 = vrot.lane.b32.xlu0 %v216, 112
    %v265 = vpop.permute.xlu0 %264
    %266 = vrot.lane.b32.xlu0 %v217, 112
    %v267 = vpop.permute.xlu0 %266
    %268 = vrot.lane.b32.xlu0 %v218, 112
    %v269 = vpop.permute.xlu0 %268
    %270 = vrot.lane.b32.xlu0 %v219, 112
    %v271 = vpop.permute.xlu0 %270
    %272 = vrot.lane.b32.xlu0 %v220, 112
    %v273 = vpop.permute.xlu0 %272
    %274 = vrot.lane.b32.xlu0 %v221, 112
    %v275 = vpop.permute.xlu0 %274
    %276 = vrot.lane.b32.xlu0 %v222, 112
    %v277 = vpop.permute.xlu0 %276
    %278 = vrot.lane.b32.xlu0 %v223, 112
    %v279 = vpop.permute.xlu0 %278
    %v288 = vadd.f32 %v216, %v265
    %v289 = vadd.f32 %v217, %v267
    %v290 = vadd.f32 %v218, %v269
    %v291 = vadd.f32 %v219, %v271
    %v292 = vadd.f32 %v220, %v273
    %v293 = vadd.f32 %v221, %v275
    %v294 = vadd.f32 %v222, %v277
    %v295 = vadd.f32 %v223, %v279
    %296 = vrot.lane.b32.xlu0 %v216, 96
    %v297 = vpop.permute.xlu0 %296
    %298 = vrot.lane.b32.xlu0 %v217, 96
    %v299 = vpop.permute.xlu0 %298
    %300 = vrot.lane.b32.xlu0 %v218, 96
    %v301 = vpop.permute.xlu0 %300
    %302 = vrot.lane.b32.xlu0 %v219, 96
    %v303 = vpop.permute.xlu0 %302
    %304 = vrot.lane.b32.xlu0 %v220, 96
    %v305 = vpop.permute.xlu0 %304
    %306 = vrot.lane.b32.xlu0 %v221, 96
    %v307 = vpop.permute.xlu0 %306
    %308 = vrot.lane.b32.xlu0 %v222, 96
    %v309 = vpop.permute.xlu0 %308
    %310 = vrot.lane.b32.xlu0 %v223, 96
    %v311 = vpop.permute.xlu0 %310
    %v320 = vadd.f32 %v288, %v297
    %v321 = vadd.f32 %v289, %v299
    %v322 = vadd.f32 %v290, %v301
    %v323 = vadd.f32 %v291, %v303
    %v324 = vadd.f32 %v292, %v305
    %v325 = vadd.f32 %v293, %v307
    %v326 = vadd.f32 %v294, %v309
    %v327 = vadd.f32 %v295, %v311
    %328 = vrot.lane.b32.xlu0 %v216, 80
    %v329 = vpop.permute.xlu0 %328
    %330 = vrot.lane.b32.xlu0 %v217, 80
    %v331 = vpop.permute.xlu0 %330
    %332 = vrot.lane.b32.xlu0 %v218, 80
    %v333 = vpop.permute.xlu0 %332
    %334 = vrot.lane.b32.xlu0 %v219, 80
    %v335 = vpop.permute.xlu0 %334
    %336 = vrot.lane.b32.xlu0 %v220, 80
    %v337 = vpop.permute.xlu0 %336
    %338 = vrot.lane.b32.xlu0 %v221, 80
    %v339 = vpop.permute.xlu0 %338
    %340 = vrot.lane.b32.xlu0 %v222, 80
    %v341 = vpop.permute.xlu0 %340
    %342 = vrot.lane.b32.xlu0 %v223, 80
    %v343 = vpop.permute.xlu0 %342
    %v352 = vadd.f32 %v320, %v329
    %v353 = vadd.f32 %v321, %v331
    %v354 = vadd.f32 %v322, %v333
    %v355 = vadd.f32 %v323, %v335
    %v356 = vadd.f32 %v324, %v337
    %v357 = vadd.f32 %v325, %v339
    %v358 = vadd.f32 %v326, %v341
    %v359 = vadd.f32 %v327, %v343
    %v360 = vmul.f32 %v352, 0.25
    %v361 = vmul.f32 %v353, 0.25
    %v362 = vmul.f32 %v354, 0.25
    %v363 = vmul.f32 %v355, 0.25
    %v364 = vmul.f32 %v356, 0.25
    %v365 = vmul.f32 %v357, 0.25
    %v366 = vmul.f32 %v358, 0.25
    %v367 = vmul.f32 %v359, 0.25
    %v376 = vrot.slane %v361, 7
    %v377 = vsel %vm165, %v376, %v360
    %v378 = vrot.slane %v362, 6
    %v379 = vsel %vm168, %v378, %v377
    %v380 = vrot.slane %v363, 5
    %v381 = vsel %vm171, %v380, %v379
    %v382 = vrot.slane %v364, 4
    %v383 = vsel %vm174, %v382, %v381
    %v384 = vrot.slane %v365, 3
    %v385 = vsel %vm177, %v384, %v383
    %v386 = vrot.slane %v366, 2
    %v387 = vsel %vm180, %v386, %v385
    %v388 = vrot.slane %v367, 1
    %v389 = vsel %vm183, %v388, %v387
    %vm391 = vcmask 130048
    %392 = vst.msk [vmem:[#allocation2] sm:$0xff] %vm391, %v389
    // Predicated region
    $region14: #{tpu_custom_call.1} parent=1 // pred_check
      _
    $region15: #{tpu_custom_call.1} parent=1 // pred_check_branch
      %394 = sbr.rel (0) target = $region17
    $region16: #{tpu_custom_call.1} parent=1 // pred_region
      _
    $region17: #{tpu_custom_call.1} parent=1 // pred_fallthru
      _
    // Predicated region
    $region18: #{tpu_custom_call.1} parent=1 // pred_check
      _
    $region19: #{tpu_custom_call.1} parent=1 // pred_check_branch
      %396 = sbr.rel (0) target = $region21
    $region20: #{tpu_custom_call.1} parent=1 // pred_region
      %398 = vsyncadd [#allocation3], 0
      %s400 = sshll.u32 [#allocation2], 4
      %s401 = int_to_ptr.vmem [resolvable:$true] %s400
      %s402 = sshll.u32 %s4, 4
      %s403 = int_to_ptr.hbm [resolvable:$true] %s402
      %405 = dma.vmem_to_hbm [thread:$0]  %s401, 128, %s403, [#allocation3]
    $region21: #{tpu_custom_call.1} parent=1 // pred_fallthru
      _
    // Predicated region
    $region22: #{tpu_custom_call.1} parent=1 // pred_check
      _
    $region23: #{tpu_custom_call.1} parent=1 // pred_check_branch
      %407 = sbr.rel (0) target = $region25
    $region24: #{tpu_custom_call.1} parent=1 // pred_region
      _
    $region25: #{tpu_custom_call.1} parent=1 // pred_fallthru
      _
    // Predicated region
    $region26: #{tpu_custom_call.1} parent=1 // pred_check
      _
    $region27: #{tpu_custom_call.1} parent=1 // pred_check_branch
      %409 = sbr.rel (0) target = $region29
    $region28: #{tpu_custom_call.1} parent=1 // pred_region
      %411 = dma.done [#allocation3], 128
    $region29: #{tpu_custom_call.1} parent=1 // pred_fallthru
      _
    %412 = vsyncpa [#allocation3], 1

</llo_original>
